<compile_context>
chip_gen: v7x
topology: tpu7x:2x2x1
jax: 0.10.0
libtpu: 0.0.40
codegen_flags: <defaults>
</compile_context>

<pallas_src>
import functools

import jax
import jax.numpy as jnp
from jax import lax
from jax.experimental import pallas as pl
from jax.experimental.pallas import tpu as pltpu


def _decoder_kernel(x_ref, w1_ref, b1_ref, w2_ref, b2_ref, o_ref, acc_ref,
                    *, seq_len, t_tile, ragged):
    # x_ref : (TB, TT, D)  input tile in its native dtype (bf16 preferred)
    # w1_ref: (D, H) bf16   b1_ref: (1, H) f32
    # w2_ref: (H, C) bf16   b2_ref: (1, C) f32
    # o_ref : (TB, C) f32   acc_ref: (TB, 1, D) f32 scratch
    k = pl.program_id(1)
    tb = acc_ref.shape[0]

    @pl.when(k == 0)
    def _init():
        acc_ref[...] = jnp.zeros_like(acc_ref)

    x = x_ref[...]
    if ragged:
        # Ragged last T tile: fold the sequence mask into the ones vector that
        # drives the MXU reduction -- O(tb*tt) work instead of an
        # iota+compare+select over the whole (tb, tt, D) tile.
        t_idx = lax.broadcasted_iota(jnp.int32, (tb, 1, t_tile), 2) + k * t_tile
        ones = (t_idx < seq_len).astype(x.dtype)
    else:
        ones = jnp.ones((tb, 1, t_tile), dtype=x.dtype)

    # Time reduction on the MXU (batched matvec, f32 accumulation) so the VPU
    # stays free and the pooling phase remains purely HBM-DMA bound.
    acc_ref[...] += jnp.einsum('bqt,btd->bqd', ones, x,
                               preferred_element_type=jnp.float32)

    @pl.when(k == pl.num_programs(1) - 1)
    def _finalize():
        # Mean folded into a single scale using the true (unpadded) T.
        pooled = acc_ref[...][:, 0, :] * (1.0 / seq_len)          # (TB, D) f32

        # fc1 + ReLU: bf16 x bf16 -> f32 MXU matmul on (D, H) weights.
        h = jnp.dot(pooled.astype(w1_ref.dtype), w1_ref[...],
                    preferred_element_type=jnp.float32)
        h = jnp.maximum(h + b1_ref[...], 0.0)                     # (TB, H)

        # fc2 on (H, C) weights.
        logits = jnp.dot(h.astype(w2_ref.dtype), w2_ref[...],
                         preferred_element_type=jnp.float32) + b2_ref[...]

        # Numerically-stable softmax over classes (PyTorch dim=1).
        # Exact divide: the denominator is only (TB, C) elements, and exact
        # normalization keeps the rows summing to 1 to f32 precision.
        m = jnp.max(logits, axis=-1, keepdims=True)
        e = jnp.exp(logits - m)
        denom = jnp.sum(e, axis=-1, keepdims=True)
        o_ref[...] = (e / denom).astype(o_ref.dtype)


def _pick_tiles(B, T, D, itemsize):
    # Batch tile: for B >= 16 use >= 2 blocks on the "parallel" axis (v7x has
    # 2 TensorCores), 8-aligned.  For tiny B keep a single full-batch block so
    # the (sublane) block dim is full-or-aligned.
    if B < 16:
        tb = B
    else:
        tb = min(64, max(8, ((B // 2) // 8) * 8))

    # Time tile: ~8 MiB per x block (double-buffered ~16 MiB), aligned to the
    # input dtype's sublane packing (8 for f32, 16 for bf16, 32 for int8).
    align = max(8, 8 * (4 // max(1, itemsize)))
    budget = 8 * 1024 * 1024
    tt = budget // max(1, tb * D * itemsize)
    if tt >= T:
        tt = T
    else:
        tt = max(align, (tt // align) * align)
    return tb, tt


def decoder_forward(x, w1, b1, w2, b2):
    """x: (B, T, D) float (bf16 preferred); w1: (H, D); b1: (H,); w2: (C, H);
    b2: (C,).  Weights follow PyTorch nn.Linear (out, in) layout."""
    B, T, D = x.shape
    H = w1.shape[0]
    C = w2.shape[0]

    tb, tt = _pick_tiles(B, T, D, x.dtype.itemsize)
    ragged = (T % tt) != 0
    grid = (pl.cdiv(B, tb), pl.cdiv(T, tt))

    # Weights resident in VMEM as bf16, pre-transposed once to the natural MXU
    # (K, N) layout -> no in-kernel transposes, half the resident VMEM.
    w1_t = jnp.asarray(w1, dtype=jnp.bfloat16).T                  # (D, H)
    w2_t = jnp.asarray(w2, dtype=jnp.bfloat16).T                  # (H, C)
    b1_2d = jnp.reshape(b1, (1, H)).astype(jnp.float32)
    b2_2d = jnp.reshape(b2, (1, C)).astype(jnp.float32)

    kernel = functools.partial(_decoder_kernel, seq_len=T, t_tile=tt,
                               ragged=ragged)

    # Explicit VMEM budget: double-buffered x tile + resident (double-buffered)
    # weights + accumulator + output, clamped below v7x's 64 MiB physical VMEM
    # (and raising v5e's 16 MiB / v6e's 32 MiB default scoped limits).
    need = (2 * tb * tt * D * x.dtype.itemsize
            + 2 * (D * H + H * C) * 2
            + tb * D * 4 + 2 * tb * C * 4
            + (4 << 20))
    vmem_limit = int(min(max(need, 32 << 20), 56 << 20))

    cost = pl.CostEstimate(
        flops=2 * B * T * D + 2 * B * D * H + 2 * B * H * C,
        transcendentals=B * C,
        bytes_accessed=(B * T * D * x.dtype.itemsize
                        + (D * H + H * C) * 2 + (H + C) * 4
                        + B * C * 4),
    )

    return pl.pallas_call(
        kernel,
        out_shape=jax.ShapeDtypeStruct((B, C), jnp.float32),
        grid=grid,
        in_specs=[
            pl.BlockSpec((tb, tt, D), lambda b, k: (b, k, 0)),    # x tiles
            pl.BlockSpec((D, H), lambda b, k: (0, 0)),            # w1^T resident
            pl.BlockSpec((1, H), lambda b, k: (0, 0)),            # b1
            pl.BlockSpec((H, C), lambda b, k: (0, 0)),            # w2^T resident
            pl.BlockSpec((1, C), lambda b, k: (0, 0)),            # b2
        ],
        out_specs=pl.BlockSpec((tb, C), lambda b, k: (b, 0)),     # same block over k
        scratch_shapes=[pltpu.VMEM((tb, 1, D), jnp.float32)],     # f32 pooling acc
        compiler_params=pltpu.CompilerParams(
            dimension_semantics=("parallel", "arbitrary"),
            vmem_limit_bytes=vmem_limit),
        cost_estimate=cost,
    )(x, w1_t, b1_2d, w2_t, b2_2d)


def _ref_forward(x, w1, b1, w2, b2):
    """Pure-JAX (f32) reference replicating the PyTorch forward."""
    xf = x.astype(jnp.float32)
    pooled = jnp.mean(xf, axis=1)                                 # (B, D)
    h = jnp.maximum(pooled @ w1.astype(jnp.float32).T + b1, 0.0)  # (B, H)
    logits = h @ w2.astype(jnp.float32).T + b2                    # (B, C)
    return jax.nn.softmax(logits, axis=-1)


if __name__ == "__main__":
    # Small shapes consistent with the module (input_dim, h_u, n_class scaled down).
    B, T, D, H, C = 2, 8, 32, 32, 16

    key = jax.random.PRNGKey(0)
    kx, kw1, kb1, kw2, kb2 = jax.random.split(key, 5)

    # Keep x in bf16 in HBM (halves the pooling-phase DMA traffic).
    x = jax.random.normal(kx, (B, T, D), dtype=jnp.float32).astype(jnp.bfloat16)
    # nn.Linear-style params: (out, in) weights, (out,) biases.
    w1 = jax.random.normal(kw1, (H, D), dtype=jnp.float32) * (1.0 / jnp.sqrt(D))
    b1 = jax.random.normal(kb1, (H,), dtype=jnp.float32) * 0.01
    w2 = jax.random.normal(kw2, (C, H), dtype=jnp.float32) * (1.0 / jnp.sqrt(H))
    b2 = jax.random.normal(kb2, (C,), dtype=jnp.float32) * 0.01

    fwd = jax.jit(decoder_forward)
    out = jax.block_until_ready(fwd(x, w1, b1, w2, b2))

    ref = _ref_forward(x, w1, b1, w2, b2)
    assert out.shape == (B, C)
    # Kernel does bf16 weights / bf16 pooled activations with f32 accumulation;
    # reference is pure f32 -> allow ~5e-3 on the probabilities.
    assert jnp.allclose(out, ref, atol=5e-3, rtol=5e-3), "mismatch vs reference"
    # Exact softmax normalization -> rows sum to 1 to f32 precision.
    assert jnp.allclose(jnp.sum(out, axis=1), 1.0, atol=1e-4), \
        "softmax rows must sum to 1"

    print("KERNEL_OK")
</pallas_src>

<mosaic_0001>
module attributes {stable_mosaic.version = 11 : i64} {
  func.func @_decoder_kernel(%arg0: i32, %arg1: i32, %arg2: memref<2x8x32xbf16, #tpu.memory_space<vmem>>, %arg3: memref<32x32xbf16, #tpu.memory_space<vmem>>, %arg4: memref<1x32xf32, #tpu.memory_space<vmem>>, %arg5: memref<32x16xbf16, #tpu.memory_space<vmem>>, %arg6: memref<1x16xf32, #tpu.memory_space<vmem>>, %arg7: memref<2x16xf32, #tpu.memory_space<vmem>>, %arg8: memref<2x1x32xf32, #tpu.memory_space<vmem>>) attributes {dimension_semantics = [#tpu.dimension_semantics<parallel>, #tpu.dimension_semantics<arbitrary>], iteration_bounds = array<i64: 1, 1>, scalar_prefetch = 0 : i64, scratch_operands = 1 : i64, tpu.core_type = #tpu.core_type<tc>, window_params = [{transform_indices = @transform_0, window_bounds = array<i64: 2, 8, 32>}, {pipeline_mode = #tpu.pipeline_mode<synchronous>, transform_indices = @transform_1, window_bounds = array<i64: 32, 32>}, {pipeline_mode = #tpu.pipeline_mode<synchronous>, transform_indices = @transform_2, window_bounds = array<i64: 1, 32>}, {pipeline_mode = #tpu.pipeline_mode<synchronous>, transform_indices = @transform_3, window_bounds = array<i64: 32, 16>}, {pipeline_mode = #tpu.pipeline_mode<synchronous>, transform_indices = @transform_4, window_bounds = array<i64: 1, 16>}, {transform_indices = @transform_5, window_bounds = array<i64: 2, 16>}]} {
    %c0_i32 = arith.constant 0 : i32
    %0 = arith.cmpi eq, %arg1, %c0_i32 : i32
    %1 = arith.extui %0 : i1 to i32
    %c0_i32_0 = arith.constant 0 : i32
    %2 = arith.cmpi ne, %1, %c0_i32_0 : i32
    scf.if %2 {
      %cst_12 = arith.constant 0.000000e+00 : f32
      %12 = vector.broadcast %cst_12 : f32 to vector<2x1x32xf32>
      %c0_13 = arith.constant 0 : index
      %c0_14 = arith.constant 0 : index
      %c0_15 = arith.constant 0 : index
      %13 = vector.load %arg8[%c0_13, %c0_14, %c0_15] : memref<2x1x32xf32, #tpu.memory_space<vmem>>, vector<2x1x32xf32>
      tpu.vector_store %arg8[%c0_13, %c0_14, %c0_15], %12 {strides = array<i32>} : memref<2x1x32xf32, #tpu.memory_space<vmem>>, vector<2x1x32xf32>,
    } else {
    }
    %c0 = arith.constant 0 : index
    %c0_1 = arith.constant 0 : index
    %c0_2 = arith.constant 0 : index
    %3 = vector.load %arg2[%c0, %c0_1, %c0_2] : memref<2x8x32xbf16, #tpu.memory_space<vmem>>, vector<2x8x32xbf16>
    %cst = arith.constant 1.000000e+00 : bf16
    %4 = vector.broadcast %cst : bf16 to vector<2x1x8xbf16>
    %c0_3 = arith.constant 0 : index
    %c0_4 = arith.constant 0 : index
    %c0_5 = arith.constant 0 : index
    %5 = vector.load %arg8[%c0_3, %c0_4, %c0_5] : memref<2x1x32xf32, #tpu.memory_space<vmem>>, vector<2x1x32xf32>
    "tpu.trace_start"() <{level = 10 : i32, message = "bqt,btd->bqd"}> : () -> ()
    %cst_6 = arith.constant dense<0.000000e+00> : vector<2x1x32xf32>
    %6 = tpu.matmul %4, %3, %cst_6 {dimension_numbers = #tpu.dot_dimension_numbers<[2], [1], [1], [2], [0, 0, 0, 1, 1, 2], [0], [0]>} : vector<2x1x8xbf16>, vector<2x8x32xbf16>, vector<2x1x32xf32> -> vector<2x1x32xf32>
    "tpu.trace_stop"() : () -> ()
    %7 = arith.addf %5, %6 : vector<2x1x32xf32>
    %c0_7 = arith.constant 0 : index
    %c0_8 = arith.constant 0 : index
    %c0_9 = arith.constant 0 : index
    %8 = vector.load %arg8[%c0_7, %c0_8, %c0_9] : memref<2x1x32xf32, #tpu.memory_space<vmem>>, vector<2x1x32xf32>
    tpu.vector_store %arg8[%c0_7, %c0_8, %c0_9], %7 {strides = array<i32>} : memref<2x1x32xf32, #tpu.memory_space<vmem>>, vector<2x1x32xf32>,
    %c0_i32_10 = arith.constant 0 : i32
    %9 = arith.cmpi eq, %arg1, %c0_i32_10 : i32
    %10 = arith.extui %9 : i1 to i32
    %c0_i32_11 = arith.constant 0 : i32
    %11 = arith.cmpi ne, %10, %c0_i32_11 : i32
    scf.if %11 {
      %c0_12 = arith.constant 0 : index
      %c0_13 = arith.constant 0 : index
      %c0_14 = arith.constant 0 : index
      %12 = vector.load %arg8[%c0_12, %c0_13, %c0_14] : memref<2x1x32xf32, #tpu.memory_space<vmem>>, vector<2x1x32xf32>
      %13 = vector.shape_cast %12 : vector<2x1x32xf32> to vector<2x32xf32>
      %cst_15 = arith.constant 1.250000e-01 : f32
      %14 = vector.broadcast %cst_15 : f32 to vector<2x32xf32>
      %15 = arith.mulf %13, %14 : vector<2x32xf32>
      %16 = arith.truncf %15 : vector<2x32xf32> to vector<2x32xbf16>
      %c0_16 = arith.constant 0 : index
      %c0_17 = arith.constant 0 : index
      %17 = vector.load %arg3[%c0_16, %c0_17] : memref<32x32xbf16, #tpu.memory_space<vmem>>, vector<32x32xbf16>
      %cst_18 = arith.constant dense<0.000000e+00> : vector<2x32xf32>
      %18 = tpu.matmul %16, %17, %cst_18 {dimension_numbers = #tpu.dot_dimension_numbers<[1], [0], [0], [1], [0, 0, 1, 1], [], []>} : vector<2x32xbf16>, vector<32x32xbf16>, vector<2x32xf32> -> vector<2x32xf32>
      %c0_19 = arith.constant 0 : index
      %c0_20 = arith.constant 0 : index
      %19 = vector.load %arg4[%c0_19, %c0_20] : memref<1x32xf32, #tpu.memory_space<vmem>>, vector<1x32xf32>
      %20 = vector.broadcast %19 : vector<1x32xf32> to vector<2x32xf32>
      %21 = arith.addf %18, %20 : vector<2x32xf32>
      %cst_21 = arith.constant 0.000000e+00 : f32
      %22 = vector.broadcast %cst_21 : f32 to vector<2x32xf32>
      %23 = arith.maximumf %21, %22 : vector<2x32xf32>
      %24 = arith.truncf %23 : vector<2x32xf32> to vector<2x32xbf16>
      %c0_22 = arith.constant 0 : index
      %c0_23 = arith.constant 0 : index
      %25 = vector.load %arg5[%c0_22, %c0_23] : memref<32x16xbf16, #tpu.memory_space<vmem>>, vector<32x16xbf16>
      %cst_24 = arith.constant dense<0.000000e+00> : vector<2x16xf32>
      %26 = tpu.matmul %24, %25, %cst_24 {dimension_numbers = #tpu.dot_dimension_numbers<[1], [0], [0], [1], [0, 0, 1, 1], [], []>} : vector<2x32xbf16>, vector<32x16xbf16>, vector<2x16xf32> -> vector<2x16xf32>
      %c0_25 = arith.constant 0 : index
      %c0_26 = arith.constant 0 : index
      %27 = vector.load %arg6[%c0_25, %c0_26] : memref<1x16xf32, #tpu.memory_space<vmem>>, vector<1x16xf32>
      %28 = vector.broadcast %27 : vector<1x16xf32> to vector<2x16xf32>
      %29 = arith.addf %26, %28 : vector<2x16xf32>
      %cst_27 = arith.constant dense<0xFF800000> : vector<2xf32>
      %30 = vector.multi_reduction <maximumf>, %29, %cst_27 [1] : vector<2x16xf32> to vector<2xf32>
      %31 = vector.shape_cast %30 : vector<2xf32> to vector<2x1xf32>
      %32 = vector.broadcast %31 : vector<2x1xf32> to vector<2x16xf32>
      %33 = arith.subf %29, %32 : vector<2x16xf32>
      %34 = math.exp %33 : vector<2x16xf32>
      %cst_28 = arith.constant dense<0.000000e+00> : vector<2xf32>
      %35 = vector.multi_reduction <add>, %34, %cst_28 [1] : vector<2x16xf32> to vector<2xf32>
      %36 = vector.shape_cast %35 : vector<2xf32> to vector<2x1xf32>
      %37 = vector.broadcast %36 : vector<2x1xf32> to vector<2x16xf32>
      %38 = arith.divf %34, %37 : vector<2x16xf32>
      %c0_29 = arith.constant 0 : index
      %c0_30 = arith.constant 0 : index
      %39 = vector.load %arg7[%c0_29, %c0_30] : memref<2x16xf32, #tpu.memory_space<vmem>>, vector<2x16xf32>
      tpu.vector_store %arg7[%c0_29, %c0_30], %38 {strides = array<i32>} : memref<2x16xf32, #tpu.memory_space<vmem>>, vector<2x16xf32>,
    } else {
    }
    return
  }
  func.func @transform_0(%arg0: i32, %arg1: i32) -> (i32, i32, i32) {
    %c0_i32 = arith.constant 0 : i32
    %c0_i32_0 = arith.constant 0 : i32
    return %arg0, %arg1, %c0_i32 : i32, i32, i32
  }
  func.func @transform_1(%arg0: i32, %arg1: i32) -> (i32, i32) {
    %c0_i32 = arith.constant 0 : i32
    %c0_i32_0 = arith.constant 0 : i32
    %c0_i32_1 = arith.constant 0 : i32
    return %c0_i32, %c0_i32_0 : i32, i32
  }
  func.func @transform_2(%arg0: i32, %arg1: i32) -> (i32, i32) {
    %c0_i32 = arith.constant 0 : i32
    %c0_i32_0 = arith.constant 0 : i32
    %c0_i32_1 = arith.constant 0 : i32
    return %c0_i32, %c0_i32_0 : i32, i32
  }
  func.func @transform_3(%arg0: i32, %arg1: i32) -> (i32, i32) {
    %c0_i32 = arith.constant 0 : i32
    %c0_i32_0 = arith.constant 0 : i32
    %c0_i32_1 = arith.constant 0 : i32
    return %c0_i32, %c0_i32_0 : i32, i32
  }
  func.func @transform_4(%arg0: i32, %arg1: i32) -> (i32, i32) {
    %c0_i32 = arith.constant 0 : i32
    %c0_i32_0 = arith.constant 0 : i32
    %c0_i32_1 = arith.constant 0 : i32
    return %c0_i32, %c0_i32_0 : i32, i32
  }
  func.func @transform_5(%arg0: i32, %arg1: i32) -> (i32, i32) {
    %c0_i32 = arith.constant 0 : i32
    %c0_i32_0 = arith.constant 0 : i32
    return %arg0, %c0_i32 : i32, i32
  }
}

</mosaic_0001>

<llo_original>
// kernel: decoder_forward.1
$region0: #{decoder_forward.1}
  #allocation0 [shape = 'u32[]', space=smem, size = 0x4, offset = 0x4, fixed_abs, tag = 'smem constant byte address 0x4 - core index']
  #allocation1 [shape = 'u32[144,128]{1,0:T(1,128)}', space=vmem, size = 0x12000, scoped, tag = 'internal scratch']
  #allocation2 [shape = 'f32[2,1,32]{2,1,0:T(1,128)}', space=vmem, size = 0x400, scoped, tag = 'scratch operand']
  %s0 = inlined_call_operand.vmem [shape: bf16[2,8,32], index: 0, kind: input, shape index: {}]
  %s1 = inlined_call_operand.vmem [shape: bf16[32,32], index: 1, kind: input, shape index: {}]
  %s2 = inlined_call_operand.vmem [shape: f32[1,32], index: 2, kind: input, shape index: {}]
  %s3 = inlined_call_operand.vmem [shape: bf16[32,16], index: 3, kind: input, shape index: {}]
  %s4 = inlined_call_operand.vmem [shape: f32[1,16], index: 4, kind: input, shape index: {}]
  %s5 = inlined_call_operand.hbm [shape: f32[2,16], index: 5, kind: output, shape index: {}]
  %s6 = sld [smem:[#allocation0]]
  $region38: #{decoder_forward.1} parent=0
    _
  %s8 = ssub.s32 1, %s6
  %s9 = scalar_select 0, %s8, %s6
  $region1: #{decoder_forward.1} parent=0
    #allocation3 [shape = 'u8[1024]{0}', space=vmem, size = 0x400, scoped, tag = 'output window, operand 0, single buffered']
    #allocation4 [shape = 's32[1]{0}', space=sflag, size = 0x4, scoped, tag = 'scoped memory for decoder_forward.1']
    %10 = vsyncpa [#allocation4], 0
    // Predicated region
    $region2: #{decoder_forward.1} parent=1 // pred_check
      _
    $region3: #{decoder_forward.1} parent=1 // pred_check_branch
      %12 = sbr.rel (0) target = $region5
    $region4: #{decoder_forward.1} parent=1 // pred_region
      _
    $region5: #{decoder_forward.1} parent=1 // pred_fallthru
      _
    // Predicated region
    $region6: #{decoder_forward.1} parent=1 // pred_check
      _
    $region7: #{decoder_forward.1} parent=1 // pred_check_branch
      %14 = sbr.rel (0) target = $region9
    $region8: #{decoder_forward.1} parent=1 // pred_region
      _
    $region9: #{decoder_forward.1} parent=1 // pred_fallthru
      _
    // Predicated region
    $region10: #{decoder_forward.1} parent=1 // pred_check
      _
    $region11: #{decoder_forward.1} parent=1 // pred_check_branch
      %16 = sbr.rel (0) target = $region13
    $region12: #{decoder_forward.1} parent=1 // pred_region
      _
    $region13: #{decoder_forward.1} parent=1 // pred_fallthru
      _
    // Predicated region
    $region14: #{decoder_forward.1} parent=1 // pred_check
      _
    $region15: #{decoder_forward.1} parent=1 // pred_check_branch
      %18 = sbr.rel (0) target = $region17
    $region16: #{decoder_forward.1} parent=1 // pred_region
      _
    $region17: #{decoder_forward.1} parent=1 // pred_fallthru
      _
    // Predicated region
    $region18: #{decoder_forward.1} parent=1 // pred_check
      _
    $region19: #{decoder_forward.1} parent=1 // pred_check_branch
      %20 = sbr.rel (0) target = $region21
    $region20: #{decoder_forward.1} parent=1 // pred_region
      _
    $region21: #{decoder_forward.1} parent=1 // pred_fallthru
      _
    %p23 = scmp.eq.s32.totalorder 0, 0
    // Predicated region
    $region22: #{decoder_forward.1} parent=1 // pred_check
      %p24 = pneg %p23
    $region23: #{decoder_forward.1} parent=1 // pred_check_branch
      %26 = sbr.rel (%p24) target = $region25
    $region24: #{decoder_forward.1} parent=1 // pred_region
      %vm27 = vcmask 253952
      %28 = vst.msk [vmem:[#allocation2] sm:$0x1] %vm27, 0.0
      %29 = vst.msk [vmem:[#allocation2 + $0x1] sm:$0x1] %vm27, 0.0
    $region25: #{decoder_forward.1} parent=1 // pred_fallthru
      _
    %v30 = vld [vmem:[%s0] sm:$0xf]
    %v31 = vld [vmem:[%s0 + $0x4] sm:$0xf]
    %v32 = vld [vmem:[#allocation2] sm:$0x1]
    %v33 = vld [vmem:[#allocation2 + $0x1] sm:$0x1]
    %vm34 = vcmask 64512
    %v36 = vsel %vm34, 1065369472, 0
    %vm38 = vcmask 1043456
    %v40 = vsel %vm38, %v30, 0
    %42 = vmatprep.subr.bf16.mxu0 0
    %43 = vmatpush1.bf16.msra.mxu0 %v40
    %44 = vmatprep.subr.bf16.mxu0 0
    %45 = vmatpush1.bf16.msra.mxu0 0
    %46 = vmatprep.subr.bf16.mxu0 0
    %47 = vmatpush1.bf16.msra.mxu0 0
    %48 = vmatprep.subr.bf16.mxu0 0
    %49 = vmatpush1.bf16.msra.mxu0 0
    %50 = vmatprep.subr.bf16.mxu0 0
    %51 = vmatpush1.bf16.msra.mxu0 0
    %52 = vmatprep.subr.bf16.mxu0 0
    %53 = vmatpush1.bf16.msra.mxu0 0
    %54 = vmatprep.subr.bf16.mxu0 0
    %55 = vmatpush1.bf16.msra.mxu0 0
    %56 = vmatprep.subr.bf16.mxu0 0
    %57 = vmatpush1.bf16.msra.mxu0 0
    %58 = vmatprep.subr.bf16.mxu0 0
    %59 = vmatpush1.bf16.msra.mxu0 0
    %60 = vmatprep.subr.bf16.mxu0 0
    %61 = vmatpush1.bf16.msra.mxu0 0
    %62 = vmatprep.subr.bf16.mxu0 0
    %63 = vmatpush1.bf16.msra.mxu0 0
    %64 = vmatprep.subr.bf16.mxu0 0
    %65 = vmatpush1.bf16.msra.mxu0 0
    %66 = vmatprep.subr.bf16.mxu0 0
    %67 = vmatpush1.bf16.msra.mxu0 0
    %68 = vmatprep.subr.bf16.mxu0 0
    %69 = vmatpush1.bf16.msra.mxu0 0
    %70 = vmatprep.subr.bf16.mxu0 0
    %71 = vmatpush1.bf16.msra.mxu0 0
    %72 = vmatprep.subr.bf16.mxu0 0
    %73 = vmatpush1.bf16.msra.mxu0 0
    %74 = vmatprep.mubr.bf16.mxu0 0
    %75 = vmatmul.mubr.bf16.gmra.mrb[0].mxu0 %v36
    %v76 = vpop.f32.mrb[0].mxu0
    %v77 = vadd.f32 0.0, %v76
    %v78 = vpop.f32.mrb[0].mxu0
    %v79 = vpop.f32.mrb[0].mxu0
    %v80 = vpop.f32.mrb[0].mxu0
    %81 = vdwg.mxu0
    %v83 = vsel %vm38, %v31, 0
    %85 = vmatprep.subr.bf16.mxu0 0
    %86 = vmatpush1.bf16.msra.mxu0 %v83
    %87 = vmatprep.subr.bf16.mxu0 0
    %88 = vmatpush1.bf16.msra.mxu0 0
    %89 = vmatprep.subr.bf16.mxu0 0
    %90 = vmatpush1.bf16.msra.mxu0 0
    %91 = vmatprep.subr.bf16.mxu0 0
    %92 = vmatpush1.bf16.msra.mxu0 0
    %93 = vmatprep.subr.bf16.mxu0 0
    %94 = vmatpush1.bf16.msra.mxu0 0
    %95 = vmatprep.subr.bf16.mxu0 0
    %96 = vmatpush1.bf16.msra.mxu0 0
    %97 = vmatprep.subr.bf16.mxu0 0
    %98 = vmatpush1.bf16.msra.mxu0 0
    %99 = vmatprep.subr.bf16.mxu0 0
    %100 = vmatpush1.bf16.msra.mxu0 0
    %101 = vmatprep.subr.bf16.mxu0 0
    %102 = vmatpush1.bf16.msra.mxu0 0
    %103 = vmatprep.subr.bf16.mxu0 0
    %104 = vmatpush1.bf16.msra.mxu0 0
    %105 = vmatprep.subr.bf16.mxu0 0
    %106 = vmatpush1.bf16.msra.mxu0 0
    %107 = vmatprep.subr.bf16.mxu0 0
    %108 = vmatpush1.bf16.msra.mxu0 0
    %109 = vmatprep.subr.bf16.mxu0 0
    %110 = vmatpush1.bf16.msra.mxu0 0
    %111 = vmatprep.subr.bf16.mxu0 0
    %112 = vmatpush1.bf16.msra.mxu0 0
    %113 = vmatprep.subr.bf16.mxu0 0
    %114 = vmatpush1.bf16.msra.mxu0 0
    %115 = vmatprep.subr.bf16.mxu0 0
    %116 = vmatpush1.bf16.msra.mxu0 0
    %117 = vmatprep.mubr.bf16.mxu0 0
    %118 = vmatmul.mubr.bf16.gmra.mrb[0].mxu0 %v36
    %v119 = vpop.f32.mrb[0].mxu0
    %v120 = vadd.f32 0.0, %v119
    %v121 = vpop.f32.mrb[0].mxu0
    %v122 = vpop.f32.mrb[0].mxu0
    %v123 = vpop.f32.mrb[0].mxu0
    %124 = vdwg.mxu0
    %v125 = vadd.f32 %v32, %v77
    %v126 = vadd.f32 %v33, %v120
    %vm127 = vcmask 253952
    %128 = vst.msk [vmem:[#allocation2] sm:$0x1] %vm127, %v125
    %129 = vst.msk [vmem:[#allocation2 + $0x1] sm:$0x1] %vm127, %v126
    // Predicated region
    $region26: #{decoder_forward.1} parent=1 // pred_check
      %p130 = pneg %p23
    $region27: #{decoder_forward.1} parent=1 // pred_check_branch
      %132 = sbr.rel (%p130) target = $region29
    $region28: #{decoder_forward.1} parent=1 // pred_region
      %v133 = vld [vmem:[#allocation2] sm:$0x1]
      %v134 = vld [vmem:[#allocation2 + $0x1] sm:$0x1]
      %v135 = vmul.f32 %v133, 0.125
      %v136 = vmul.f32 %v134, 0.125
      %v137 = vpack.c.bf16 %v135, %v135
      %v138 = vpack.c.bf16 %v136, %v136
      %v139 = vld [vmem:[%s1] sm:$0xf]
      %v140 = vld [vmem:[%s1 + $0x4] sm:$0xf]
      %v141 = vld [vmem:[%s1 + $0x8] sm:$0xf]
      %v142 = vld [vmem:[%s1 + $0xc] sm:$0xf]
      %v143 = vld [vmem:[%s2] sm:$0x1]
      %v145 = vlaneseq
      %v146 = vshrl.u32 %v145, 7
      %v147 = vsub.s32 0, %v146
      %v148 = vrot.slane %v143, %v147
      %v152 = vunpack.c.l.b16 %v137
      %v153 = vunpack.c.l.b16 %v138
      %v154 = vrot.slane %v153, 7
      %vm155 = vcmask 1041409
      %v156 = vsel %vm155, %v154, %v152
      %v157 = vpack.c.b16 %v156, %v156
      %v162 = vunpack.c.l.b16 %v139
      %v163 = vunpack.c.l.b16 %v140
      %v164 = vunpack.c.l.b16 %v141
      %v165 = vunpack.c.l.b16 %v142
      %v166 = vpack.c.b16 %v163, %v162
      %v167 = vpack.c.b16 %v165, %v164
      %vm170 = vcmask 261120
      %v172 = vsel %vm170, %v157, 0
      %174 = vmatprep.subr.bf16.mxu0 0
      %175 = vmatpush1.bf16.msra.mxu0 %v166
      %176 = vmatprep.subr.bf16.mxu0 0
      %177 = vmatpush1.bf16.msra.mxu0 %v167
      %178 = vmatprep.subr.bf16.mxu0 0
      %179 = vmatpush1.bf16.msra.mxu0 0
      %180 = vmatprep.subr.bf16.mxu0 0
      %181 = vmatpush1.bf16.msra.mxu0 0
      %182 = vmatprep.subr.bf16.mxu0 0
      %183 = vmatpush1.bf16.msra.mxu0 0
      %184 = vmatprep.subr.bf16.mxu0 0
      %185 = vmatpush1.bf16.msra.mxu0 0
      %186 = vmatprep.subr.bf16.mxu0 0
      %187 = vmatpush1.bf16.msra.mxu0 0
      %188 = vmatprep.subr.bf16.mxu0 0
      %189 = vmatpush1.bf16.msra.mxu0 0
      %190 = vmatprep.subr.bf16.mxu0 0
      %191 = vmatpush1.bf16.msra.mxu0 0
      %192 = vmatprep.subr.bf16.mxu0 0
      %193 = vmatpush1.bf16.msra.mxu0 0
      %194 = vmatprep.subr.bf16.mxu0 0
      %195 = vmatpush1.bf16.msra.mxu0 0
      %196 = vmatprep.subr.bf16.mxu0 0
      %197 = vmatpush1.bf16.msra.mxu0 0
      %198 = vmatprep.subr.bf16.mxu0 0
      %199 = vmatpush1.bf16.msra.mxu0 0
      %200 = vmatprep.subr.bf16.mxu0 0
      %201 = vmatpush1.bf16.msra.mxu0 0
      %202 = vmatprep.subr.bf16.mxu0 0
      %203 = vmatpush1.bf16.msra.mxu0 0
      %204 = vmatprep.subr.bf16.mxu0 0
      %205 = vmatpush1.bf16.msra.mxu0 0
      %206 = vmatprep.mubr.bf16.mxu0 0
      %207 = vmatmul.mubr.bf16.gmra.mrb[0].mxu0 %v172
      %v208 = vpop.f32.mrb[0].mxu0
      %v209 = vadd.f32 %v148, %v208
      %v210 = vpop.f32.mrb[0].mxu0
      %v211 = vpop.f32.mrb[0].mxu0
      %v212 = vpop.f32.mrb[0].mxu0
      %213 = vdwg.mxu0
      %v214 = vmax.f32 %v209, 0.0
      %v215 = vpack.c.bf16 %v214, %v214
      %v216 = vld [vmem:[%s3] sm:$0xf]
      %v217 = vld [vmem:[%s3 + $0x4] sm:$0xf]
      %v218 = vld [vmem:[%s3 + $0x8] sm:$0xf]
      %v219 = vld [vmem:[%s3 + $0xc] sm:$0xf]
      %v220 = vld [vmem:[%s4] sm:$0x1]
      %v222 = vlaneseq
      %v223 = vshrl.u32 %v222, 7
      %v224 = vsub.s32 0, %v223
      %v225 = vrot.slane %v220, %v224
      %v231 = vunpack.c.l.b16 %v216
      %v232 = vunpack.c.l.b16 %v217
      %v233 = vunpack.c.l.b16 %v218
      %v234 = vunpack.c.l.b16 %v219
      %v235 = vpack.c.b16 %v232, %v231
      %v236 = vpack.c.b16 %v234, %v233
      %v240 = vsel %vm170, %v215, 0
      %242 = vmatprep.subr.bf16.mxu0 0
      %243 = vmatpush1.bf16.msra.mxu0 %v235
      %244 = vmatprep.subr.bf16.mxu0 0
      %245 = vmatpush1.bf16.msra.mxu0 %v236
      %246 = vmatprep.subr.bf16.mxu0 0
      %247 = vmatpush1.bf16.msra.mxu0 0
      %248 = vmatprep.subr.bf16.mxu0 0
      %249 = vmatpush1.bf16.msra.mxu0 0
      %250 = vmatprep.subr.bf16.mxu0 0
      %251 = vmatpush1.bf16.msra.mxu0 0
      %252 = vmatprep.subr.bf16.mxu0 0
      %253 = vmatpush1.bf16.msra.mxu0 0
      %254 = vmatprep.subr.bf16.mxu0 0
      %255 = vmatpush1.bf16.msra.mxu0 0
      %256 = vmatprep.subr.bf16.mxu0 0
      %257 = vmatpush1.bf16.msra.mxu0 0
      %258 = vmatprep.subr.bf16.mxu0 0
      %259 = vmatpush1.bf16.msra.mxu0 0
      %260 = vmatprep.subr.bf16.mxu0 0
      %261 = vmatpush1.bf16.msra.mxu0 0
      %262 = vmatprep.subr.bf16.mxu0 0
      %263 = vmatpush1.bf16.msra.mxu0 0
      %264 = vmatprep.subr.bf16.mxu0 0
      %265 = vmatpush1.bf16.msra.mxu0 0
      %266 = vmatprep.subr.bf16.mxu0 0
      %267 = vmatpush1.bf16.msra.mxu0 0
      %268 = vmatprep.subr.bf16.mxu0 0
      %269 = vmatpush1.bf16.msra.mxu0 0
      %270 = vmatprep.subr.bf16.mxu0 0
      %271 = vmatpush1.bf16.msra.mxu0 0
      %272 = vmatprep.subr.bf16.mxu0 0
      %273 = vmatpush1.bf16.msra.mxu0 0
      %274 = vmatprep.mubr.bf16.mxu0 0
      %275 = vmatmul.mubr.bf16.gmra.mrb[0].mxu0 %v240
      %v276 = vpop.f32.mrb[0].mxu0
      %v277 = vadd.f32 %v225, %v276
      %v278 = vpop.f32.mrb[0].mxu0
      %v279 = vpop.f32.mrb[0].mxu0
      %v280 = vpop.f32.mrb[0].mxu0
      %281 = vdwg.mxu0
      %vm282 = vcmask 123904
      %v283 = vsel %vm282, %v277, -inf
      %284 = vmax.xlane.f32.xlu0 %v283
      %v285 = vpop.xlane.xlu0 %284
      %v286 = vsub.f32 %v277, %v285
      %v287 = vmul.f32 %v286, 1.442695
      %v288 = vpow.pop %v287
      %v289 = vsel %vm282, %v288, 0.0
      %290 = vadd.xlane.f32.xlu0 %v289
      %v291 = vpop.xlane.xlu0 %290
      %v292 = vrcp.pop %v291
      %v293 = vmul.f32 %v288, %v292
      %294 = vst.msk [vmem:[#allocation3] sm:$0x3] %vm282, %v293
    $region29: #{decoder_forward.1} parent=1 // pred_fallthru
      _
    // Predicated region
    $region30: #{decoder_forward.1} parent=1 // pred_check
      _
    $region31: #{decoder_forward.1} parent=1 // pred_check_branch
      %296 = sbr.rel (0) target = $region33
    $region32: #{decoder_forward.1} parent=1 // pred_region
      %s298 = ssub.s32 32, 32
      %299 = vsyncadd [#allocation4], %s298
      %s301 = sshll.u32 [#allocation3], 4
      %s302 = int_to_ptr.vmem [resolvable:$true] %s301
      %304 = dma.vmem_to_hbm [thread:$0]  %s302, 32, %s5, [#allocation4]
    $region33: #{decoder_forward.1} parent=1 // pred_fallthru
      _
    // Predicated region
    $region34: #{decoder_forward.1} parent=1 // pred_check
      _
    $region35: #{decoder_forward.1} parent=1 // pred_check_branch
      %306 = sbr.rel (0) target = $region37
    $region36: #{decoder_forward.1} parent=1 // pred_region
      %307 = dma.done [#allocation4], 32
    $region37: #{decoder_forward.1} parent=1 // pred_fallthru
      _
    %308 = vsyncpa [#allocation4], 1

</llo_original>
